<compile_context>
chip_gen: v5e
topology: v5e:2x2
jax: 0.10.0
libtpu: 0.0.40
codegen_flags: <defaults>
</compile_context>

<pallas_src>
import jax
import jax.numpy as jnp
from jax.experimental import pallas as pl
from jax.experimental.pallas import tpu as pltpu

_LANES = 1024          # lane-dense row width (multiple of 128)
_MAX_ROW_TILE = 512    # 512 * 1024 * 4 B = 2 MiB per f32 block


def _swish_kernel(x_ref, o_ref):
    x = x_ref[...].astype(jnp.float32)
    # sigmoid(x) = 0.5 * (tanh(0.5 * x) + 1): one EUP op, no exp overflow.
    sig = 0.5 * (jnp.tanh(0.5 * x) + 1.0)
    o_ref[...] = (x * sig).astype(o_ref.dtype)


def _pick_row_tile(rows: int) -> int:
    """Rows per block: multiple of 8 (sublane), capped at _MAX_ROW_TILE, and
    yielding >= 2 grid steps when the input is big enough (v7x megacore)."""
    if rows < 16:
        return rows                       # single full-extent block (tiny input)
    half = -(-rows // 2)                  # ceil(rows / 2)
    return max(8, min(_MAX_ROW_TILE, (half // 8) * 8))


def _swish_2d(x2):
    rows, lanes = x2.shape
    row_tile = _pick_row_tile(rows)
    return pl.pallas_call(
        _swish_kernel,
        out_shape=jax.ShapeDtypeStruct((rows, lanes), x2.dtype),
        grid_spec=pltpu.PrefetchScalarGridSpec(
            num_scalar_prefetch=0,
            grid=(pl.cdiv(rows, row_tile),),     # partial last block is masked
            in_specs=[pl.BlockSpec((row_tile, lanes), lambda i: (i, 0))],
            out_specs=pl.BlockSpec((row_tile, lanes), lambda i: (i, 0)),
        ),
        compiler_params=pltpu.CompilerParams(
            dimension_semantics=("parallel",)),
    )(x2)


def swish(x):
    """Elementwise x * sigmoid(x) (Swish / SiLU). Accepts any shape."""
    orig_shape = x.shape
    x_flat = x.reshape(-1)
    n = x_flat.shape[0]
    rows = n // _LANES
    main_n = rows * _LANES

    if rows == 0:
        # Too small to be worth a kernel launch: plain JAX fallback.
        return (x * jax.nn.sigmoid(x)).astype(x.dtype)

    main = _swish_2d(x_flat[:main_n].reshape(rows, _LANES)).reshape(-1)

    if main_n == n:
        return main.reshape(orig_shape)

    tail = x_flat[main_n:]                       # < 1024 elements
    tail_out = (tail * jax.nn.sigmoid(tail)).astype(x.dtype)
    return jnp.concatenate([main, tail_out]).reshape(orig_shape)


if __name__ == "__main__":
    key = jax.random.PRNGKey(0)
    k1, k2 = jax.random.split(key)

    # Shapes consistent with the PINN MLP (hidden width nn = 220).
    x = jax.random.normal(k1, (128, 220), dtype=jnp.float32)
    y = swish(x)
    jax.block_until_ready(y)
    y_ref = x * jax.nn.sigmoid(x)
    assert y.shape == x.shape and y.dtype == x.dtype
    assert float(jnp.max(jnp.abs(y - y_ref))) < 1e-5

    # Odd shape: exercises the lane-dense main path plus the flat JAX tail.
    x2 = jax.random.normal(k2, (3, 7, 220), dtype=jnp.float32)
    y2 = swish(x2)
    jax.block_until_ready(y2)
    y2_ref = x2 * jax.nn.sigmoid(x2)
    assert y2.shape == x2.shape and y2.dtype == x2.dtype
    assert float(jnp.max(jnp.abs(y2 - y2_ref))) < 1e-5

    print("KERNEL_OK")
</pallas_src>

<mosaic_0001>
module attributes {stable_mosaic.version = 11 : i64} {
  func.func @_swish_kernel(%arg0: i32, %arg1: memref<8x1024xf32, #tpu.memory_space<vmem>>, %arg2: memref<8x1024xf32, #tpu.memory_space<vmem>>) attributes {dimension_semantics = [#tpu.dimension_semantics<parallel>], iteration_bounds = array<i64: 4>, scalar_prefetch = 0 : i64, scratch_operands = 0 : i64, tpu.core_type = #tpu.core_type<tc>, window_params = [{transform_indices = @transform_0, window_bounds = array<i64: 8, 1024>}, {transform_indices = @transform_1, window_bounds = array<i64: 8, 1024>}]} {
    %c0 = arith.constant 0 : index
    %c0_0 = arith.constant 0 : index
    %0 = vector.load %arg1[%c0, %c0_0] : memref<8x1024xf32, #tpu.memory_space<vmem>>, vector<8x1024xf32>
    %cst = arith.constant 5.000000e-01 : f32
    %1 = vector.broadcast %cst : f32 to vector<8x1024xf32>
    %2 = arith.mulf %1, %0 : vector<8x1024xf32>
    %3 = math.tanh %2 : vector<8x1024xf32>
    %cst_1 = arith.constant 1.000000e+00 : f32
    %4 = vector.broadcast %cst_1 : f32 to vector<8x1024xf32>
    %5 = arith.addf %3, %4 : vector<8x1024xf32>
    %cst_2 = arith.constant 5.000000e-01 : f32
    %6 = vector.broadcast %cst_2 : f32 to vector<8x1024xf32>
    %7 = arith.mulf %6, %5 : vector<8x1024xf32>
    %8 = arith.mulf %0, %7 : vector<8x1024xf32>
    %c0_3 = arith.constant 0 : index
    %c0_4 = arith.constant 0 : index
    %9 = vector.load %arg2[%c0_3, %c0_4] : memref<8x1024xf32, #tpu.memory_space<vmem>>, vector<8x1024xf32>
    tpu.vector_store %arg2[%c0_3, %c0_4], %8 {strides = array<i32>} : memref<8x1024xf32, #tpu.memory_space<vmem>>, vector<8x1024xf32>,
    return
  }
  func.func @transform_0(%arg0: i32) -> (i32, i32) {
    %c0_i32 = arith.constant 0 : i32
    %c0_i32_0 = arith.constant 0 : i32
    return %arg0, %c0_i32 : i32, i32
  }
  func.func @transform_1(%arg0: i32) -> (i32, i32) {
    %c0_i32 = arith.constant 0 : i32
    %c0_i32_0 = arith.constant 0 : i32
    return %arg0, %c0_i32 : i32, i32
  }
}

</mosaic_0001>

<llo_original>
// kernel: tpu_custom_call.1
$region0: #{tpu_custom_call.1}
  #allocation0 [shape = 'u32[]', space=smem, size = 0x4, offset = 0x4, fixed_abs, tag = 'smem constant byte address 0x4 - core index']
  #allocation1 [shape = 'u32[72,128]{1,0:T(1,128)}', space=vmem, size = 0x9000, scoped, tag = 'internal scratch']
  %s0 = inlined_call_operand.hbm [shape: f32[27,1024], index: 0, kind: input, shape index: {}]
  %s1 = inlined_call_operand.hbm [shape: f32[27,1024], index: 1, kind: output, shape index: {}]
  %s2 = sld [smem:[#allocation0]]
  $region41: #{tpu_custom_call.1} parent=0
    _
  %s4 = ssub.s32 1, %s2
  %s5 = scalar_select 0, %s4, %s2
  $region1: #{tpu_custom_call.1} parent=0
    #allocation2 [shape = 'u8[65536]{0}', space=vmem, size = 0x10000, scoped, tag = 'input window, operand 0']
    #allocation3 [shape = 's32[2]{0}', space=sflag, size = 0x8, scoped, tag = 'scoped memory for tpu_custom_call.1']
    #allocation4 [shape = 's32[2]{0}', space=sflag, size = 0x8, scoped, tag = 'scoped memory for tpu_custom_call.1']
    #allocation5 [shape = 'u8[65536]{0}', space=vmem, size = 0x10000, scoped, tag = 'output window, operand 0']
    %6 = vsyncpa [#allocation3], 0
    %s7 = scalar_lea.sflag [#allocation3], 1
    %8 = vsyncpa %s7, 0
    %9 = vsyncpa [#allocation4], 0
    %s10 = scalar_lea.sflag [#allocation4], 1
    %11 = vsyncpa %s10, 0
    loop: start=0, step=1, limit=6
    $region2: #{tpu_custom_call.1} parent=1 // loop_pre_header
      _
    $region3: #{tpu_custom_call.1} parent=1 // loop_header
      %s13 = sphi 0, %s17
      %p14 = scmp.ge.s32.totalorder %s13, 6
      %s23 = sphi 0, %s25
      %s26 = sphi 0, %s23
      %s27 = sphi 0, %s26
      %s43 = sphi 0, %s27
      %s49 = sphi 0, %s51
      %s52 = sphi 0, %s49
      %s53 = sphi 0, %s52
      %s69 = sphi 0, %s53
    $region4: #{tpu_custom_call.1} parent=1 // loop_header_branch
      %16 = sbr.rel (%p14) target = $region8
    $region5: #{tpu_custom_call.1} parent=1 // loop_body
      %s18 = ssub.s32 %s13, 1
      %s19 = ssub.s32 %s13, 2
      %s20 = sadd.s32 %s13, 1
      %s21 = ssub.s32 %s13, %s20
      %p22 = scmp.eq.s32.totalorder %s21, 0
      %s24 = sadd.s32 %s23, 1
      %s25 = scalar_select %p22, %s23, %s24
      %p28 = pneg %p22
      %p29 = scmp.eq.s32.totalorder %s13, 3
      %p30 = por %p28, %p29
      %p31 = scmp.ne.s32.totalorder %s23, %s26
      %p32 = scmp.eq.s32.totalorder %s13, 0
      %p33 = por %p31, %p32
      %p34 = scmp.ne.s32.totalorder %s23, %s26
      %p35 = scmp.eq.s32.totalorder %s18, 3
      %p36 = por %p34, %p35
      %p37 = scmp.ne.s32.totalorder %s26, %s27
      %p38 = scmp.eq.s32.totalorder %s18, 0
      %p39 = por %p37, %p38
      %p40 = scmp.ne.s32.totalorder %s26, %s27
      %p41 = scmp.eq.s32.totalorder %s19, 3
      %p42 = por %p40, %p41
      %p44 = scmp.ne.s32.totalorder %s27, %s43
      %p45 = scmp.eq.s32.totalorder %s19, 0
      %p46 = por %p44, %p45
      %s47 = ssub.s32 %s13, %s20
      %p48 = scmp.eq.s32.totalorder %s47, 0
      %s50 = sadd.s32 %s49, 1
      %s51 = scalar_select %p48, %s49, %s50
      %p54 = pneg %p48
      %p55 = scmp.eq.s32.totalorder %s13, 3
      %p56 = por %p54, %p55
      %p57 = scmp.ne.s32.totalorder %s49, %s52
      %p58 = scmp.eq.s32.totalorder %s13, 0
      %p59 = por %p57, %p58
      %p60 = scmp.ne.s32.totalorder %s49, %s52
      %p61 = scmp.eq.s32.totalorder %s18, 3
      %p62 = por %p60, %p61
      %p63 = scmp.ne.s32.totalorder %s52, %s53
      %p64 = scmp.eq.s32.totalorder %s18, 0
      %p65 = por %p63, %p64
      %p66 = scmp.ne.s32.totalorder %s52, %s53
      %p67 = scmp.eq.s32.totalorder %s19, 3
      %p68 = por %p66, %p67
      %p70 = scmp.ne.s32.totalorder %s53, %s69
      %p71 = scmp.eq.s32.totalorder %s19, 0
      %p72 = por %p70, %p71
      %p73 = scmp.le.s32.totalorder 1, %s13
      %p74 = scmp.lt.s32.totalorder %s13, 5
      %p75 = pnand %p73, %p74
      %p76 = pneg %p75
      // Predicated region
      $region9: #{tpu_custom_call.1} parent=5 // pred_check
        _
      $region10: #{tpu_custom_call.1} parent=5 // pred_check_branch
        %78 = sbr.rel (%p75) target = $region12
      $region11: #{tpu_custom_call.1} parent=5 // pred_region
        %s79 = ssub.s32 %s13, 1
      $region12: #{tpu_custom_call.1} parent=5 // pred_fallthru
        _
      %p80 = scmp.lt.s32.totalorder %s13, 4
      // Predicated region
      $region13: #{tpu_custom_call.1} parent=5 // pred_check
        %p81 = pneg %p80
      $region14: #{tpu_custom_call.1} parent=5 // pred_check_branch
        %83 = sbr.rel (%p81) target = $region16
      $region15: #{tpu_custom_call.1} parent=5 // pred_region
        // Predicated region
        $region17: #{tpu_custom_call.1} parent=15 // pred_check
          %p84 = pneg %p33
        $region18: #{tpu_custom_call.1} parent=15 // pred_check_branch
          %86 = sbr.rel (%p84) target = $region20
        $region19: #{tpu_custom_call.1} parent=15 // pred_region
          %s87 = sand.u32 %s23, 1
          %s88 = scalar_lea.sflag [#allocation3], %s87
          %s89 = sand.u32 %s23, 1
          %s90 = smul.addr %s89, 64
          %s91 = scalar_lea.vmem [#allocation2], %s90
          %93 = vsyncadd %s88, 0
          %s94 = smul.addr %s13, 8
          %s95 = smul.addr %s94, 8
          %s96 = scalar_lea.hbm %s0, %s95
          %s98 = sshll.u32 %s96, 4
          %s99 = int_to_ptr.hbm [resolvable:$true] %s98
          %s100 = sshll.u32 %s91, 4
          %s101 = int_to_ptr.vmem [resolvable:$true] %s100
          %103 = dma.hbm_to_vmem [thread:$0]  %s99, 1024, %s101, %s88
        $region20: #{tpu_custom_call.1} parent=15 // pred_fallthru
          _
      $region16: #{tpu_custom_call.1} parent=5 // pred_fallthru
        _
      %p104 = scmp.le.s32.totalorder 1, %s13
      %p105 = scmp.lt.s32.totalorder %s13, 5
      %p106 = pnand %p104, %p105
      %p107 = pneg %p106
      // Predicated region
      $region21: #{tpu_custom_call.1} parent=5 // pred_check
        _
      $region22: #{tpu_custom_call.1} parent=5 // pred_check_branch
        %109 = sbr.rel (%p106) target = $region24
      $region23: #{tpu_custom_call.1} parent=5 // pred_region
        %s110 = ssub.s32 %s13, 1
        %s111 = sand.u32 %s26, 1
        %s112 = scalar_lea.sflag [#allocation3], %s111
        %s113 = sand.u32 %s26, 1
        %s114 = smul.addr %s113, 64
        %s115 = scalar_lea.vmem [#allocation2], %s114
        // Predicated region
        $region25: #{tpu_custom_call.1} parent=23 // pred_check
          %p116 = pneg %p39
        $region26: #{tpu_custom_call.1} parent=23 // pred_check_branch
          %118 = sbr.rel (%p116) target = $region28
        $region27: #{tpu_custom_call.1} parent=23 // pred_region
          %120 = dma.done %s112, 1024
        $region28: #{tpu_custom_call.1} parent=23 // pred_fallthru
          _
        %s121 = sand.u32 %s26, 1
        %s122 = scalar_lea.sflag [#allocation3], %s121
        %s123 = sand.u32 %s26, 1
        %s124 = smul.addr %s123, 64
        %s125 = scalar_lea.vmem [#allocation2], %s124
        %p126 = pneg %p39
        %p127 = pneg %p36
        %p128 = pneg %p65
        %p129 = pneg %p62
        %s130 = sand.u32 %s52, 1
        %s131 = scalar_lea.sflag [#allocation4], %s130
        %s132 = sand.u32 %s52, 1
        %s133 = smul.addr %s132, 64
        %s134 = scalar_lea.vmem [#allocation5], %s133
        %v135 = vld [vmem:[%s115] sm:$0xff]
        %v136 = vld [vmem:[%s115 + $0x8] sm:$0xff]
        %v137 = vld [vmem:[%s115 + $0x10] sm:$0xff]
        %v138 = vld [vmem:[%s115 + $0x18] sm:$0xff]
        %v139 = vld [vmem:[%s115 + $0x20] sm:$0xff]
        %v140 = vld [vmem:[%s115 + $0x28] sm:$0xff]
        %v141 = vld [vmem:[%s115 + $0x30] sm:$0xff]
        %v142 = vld [vmem:[%s115 + $0x38] sm:$0xff]
        %v143 = vmul.f32 %v135, 0.5
        %v144 = vmul.f32 %v136, 0.5
        %v145 = vmul.f32 %v137, 0.5
        %v146 = vmul.f32 %v138, 0.5
        %v147 = vmul.f32 %v139, 0.5
        %v148 = vmul.f32 %v140, 0.5
        %v149 = vmul.f32 %v141, 0.5
        %v150 = vmul.f32 %v142, 0.5
        %v151 = vtanh.pop %v143
        %v152 = vtanh.pop %v144
        %v153 = vtanh.pop %v145
        %v154 = vtanh.pop %v146
        %v155 = vtanh.pop %v147
        %v156 = vtanh.pop %v148
        %v157 = vtanh.pop %v149
        %v158 = vtanh.pop %v150
        %v159 = vadd.f32 %v151, 1.0
        %v160 = vadd.f32 %v152, 1.0
        %v161 = vadd.f32 %v153, 1.0
        %v162 = vadd.f32 %v154, 1.0
        %v163 = vadd.f32 %v155, 1.0
        %v164 = vadd.f32 %v156, 1.0
        %v165 = vadd.f32 %v157, 1.0
        %v166 = vadd.f32 %v158, 1.0
        %v167 = vmul.f32 %v159, 0.5
        %v168 = vmul.f32 %v160, 0.5
        %v169 = vmul.f32 %v161, 0.5
        %v170 = vmul.f32 %v162, 0.5
        %v171 = vmul.f32 %v163, 0.5
        %v172 = vmul.f32 %v164, 0.5
        %v173 = vmul.f32 %v165, 0.5
        %v174 = vmul.f32 %v166, 0.5
        %v175 = vmul.f32 %v135, %v167
        %v176 = vmul.f32 %v136, %v168
        %v177 = vmul.f32 %v137, %v169
        %v178 = vmul.f32 %v138, %v170
        %v179 = vmul.f32 %v139, %v171
        %v180 = vmul.f32 %v140, %v172
        %v181 = vmul.f32 %v141, %v173
        %v182 = vmul.f32 %v142, %v174
        %183 = vst [vmem:[%s134] sm:$0xff] %v175
        %184 = vst [vmem:[%s134 + $0x8] sm:$0xff] %v176
        %185 = vst [vmem:[%s134 + $0x10] sm:$0xff] %v177
        %186 = vst [vmem:[%s134 + $0x18] sm:$0xff] %v178
        %187 = vst [vmem:[%s134 + $0x20] sm:$0xff] %v179
        %188 = vst [vmem:[%s134 + $0x28] sm:$0xff] %v180
        %189 = vst [vmem:[%s134 + $0x30] sm:$0xff] %v181
        %190 = vst [vmem:[%s134 + $0x38] sm:$0xff] %v182
        %s191 = sand.u32 %s52, 1
        %s192 = scalar_lea.sflag [#allocation4], %s191
        %s193 = sand.u32 %s52, 1
        %s194 = smul.addr %s193, 64
        %s195 = scalar_lea.vmem [#allocation5], %s194
        // Predicated region
        $region29: #{tpu_custom_call.1} parent=23 // pred_check
          %p196 = pneg %p62
        $region30: #{tpu_custom_call.1} parent=23 // pred_check_branch
          %198 = sbr.rel (%p196) target = $region32
        $region31: #{tpu_custom_call.1} parent=23 // pred_region
          %200 = vsyncadd %s192, 0
          %s201 = smul.addr %s18, 8
          %s202 = smul.addr %s201, 8
          %s203 = scalar_lea.hbm %s1, %s202
          %s205 = sshll.u32 %s195, 4
          %s206 = int_to_ptr.vmem [resolvable:$true] %s205
          %s207 = sshll.u32 %s203, 4
          %s208 = int_to_ptr.hbm [resolvable:$true] %s207
          %210 = dma.vmem_to_hbm [thread:$0]  %s206, 1024, %s208, %s192
        $region32: #{tpu_custom_call.1} parent=23 // pred_fallthru
          _
      $region24: #{tpu_custom_call.1} parent=5 // pred_fallthru
        _
      %p211 = scmp.le.s32.totalorder 2, %s13
      // Predicated region
      $region33: #{tpu_custom_call.1} parent=5 // pred_check
        %p212 = pneg %p211
      $region34: #{tpu_custom_call.1} parent=5 // pred_check_branch
        %214 = sbr.rel (%p212) target = $region36
      $region35: #{tpu_custom_call.1} parent=5 // pred_region
        %s215 = ssub.s32 %s13, 2
        // Predicated region
        $region37: #{tpu_custom_call.1} parent=35 // pred_check
          %p216 = pneg %p68
        $region38: #{tpu_custom_call.1} parent=35 // pred_check_branch
          %218 = sbr.rel (%p216) target = $region40
        $region39: #{tpu_custom_call.1} parent=35 // pred_region
          %s219 = sand.u32 %s53, 1
          %s220 = scalar_lea.sflag [#allocation4], %s219
          %s221 = sand.u32 %s53, 1
          %s222 = smul.addr %s221, 64
          %s223 = scalar_lea.vmem [#allocation5], %s222
          %225 = dma.done %s220, 1024
        $region40: #{tpu_custom_call.1} parent=35 // pred_fallthru
          _
      $region36: #{tpu_custom_call.1} parent=5 // pred_fallthru
        _
    $region6: #{tpu_custom_call.1} parent=1 // loop_footer
      %s17 = sadd.s32 1, %s13
    $region7: #{tpu_custom_call.1} parent=1 // loop_footer_branch
      %12 = sbr.rel target = $region3
    $region8: #{tpu_custom_call.1} parent=1 // loop_exit
      _
    %226 = vsyncpa [#allocation3], 1
    %s227 = scalar_lea.sflag [#allocation3], 1
    %228 = vsyncpa %s227, 1
    %229 = vsyncpa [#allocation4], 1
    %s230 = scalar_lea.sflag [#allocation4], 1
    %231 = vsyncpa %s230, 1

</llo_original>
